<compile_context>
chip_gen: v7x
topology: tpu7x:2x2x1
jax: 0.10.0
libtpu: 0.0.40
codegen_flags: <defaults>
</compile_context>

<pallas_src>
import functools

import jax
import jax.numpy as jnp
from jax import lax
from jax.experimental import pallas as pl
from jax.experimental.pallas import tpu as pltpu


def _round_up(n, m):
    return ((n + m - 1) // m) * m


def _seizure_mlp_kernel(x_ref, w1_ref, b1_ref, w2_ref, b2_ref,
                        w3_ref, b3_ref, w4_ref, b4_ref, o_ref):
    # x_ref: (tb, 178); w*_ref are (in, out); b1..b3 are (1, out) VMEM rows;
    # w4_ref is (1, 32); b4_ref is a (1,) SMEM scalar; o_ref is (1, 1, tb).
    x = x_ref[...]
    h = jnp.dot(x, w1_ref[...], preferred_element_type=jnp.float32) + b1_ref[...]
    h = jnp.maximum(h, 0.0)
    h = jnp.dot(h, w2_ref[...], preferred_element_type=jnp.float32) + b2_ref[...]
    h = jnp.maximum(h, 0.0)
    h = jnp.dot(h, w3_ref[...], preferred_element_type=jnp.float32) + b3_ref[...]
    h = jnp.maximum(h, 0.0)                                   # (tb, 32)
    # Layer 4 (32 -> 1), produced lane-major: (1,32) . (tb,32)^T -> (1, tb).
    # This keeps the output lane-dense (dense vst) instead of a (tb, 1) sublane-major
    # result that would force masked partial stores.
    z = lax.dot_general(w4_ref[...], h, (((1,), (1,)), ((), ())),
                        preferred_element_type=jnp.float32)   # (1, tb)
    z = z + b4_ref[0]
    o_ref[0] = jax.nn.sigmoid(z)                              # write (1, tb) row


@functools.partial(jax.jit, static_argnames=("block_b",))
def seizure_nn_forward(x, params, *, block_b=4096):
    """x: (B, 178) float32. params: dict of w1..w4 (in, out) and b1..b4 (out,).

    block_b: max batch tile.  4096 keeps the per-step footprint (~9.5 MiB incl. double
    buffering and layer intermediates) inside v5e's 16 MiB default scoped VMEM; on
    v6e/v7x (32 MiB default scoped) it can be raised to ~8192 for slightly better
    per-step overhead amortization.  Weights stay VMEM-resident across grid steps.
    """
    B = x.shape[0]
    w1, b1 = params["w1"], params["b1"]   # (178, 128), (128,)
    w2, b2 = params["w2"], params["b2"]   # (128,  64), (64,)
    w3, b3 = params["w3"], params["b3"]   # (64,   32), (32,)
    w4, b4 = params["w4"], params["b4"]   # (32,    1), (1,)

    # Batch tile: multiple of 8 (sublane), capped at block_b, and capped at ~ceil(B/2)
    # so the grid has at least 2 steps (lets both v7x TensorCores take "parallel" work).
    half = -(-B // 2)
    tb = min(block_b, max(8, _round_up(half, 8)))
    num_tiles = pl.cdiv(B, tb)            # partial trailing block handled by Pallas

    w4_row = w4.reshape(1, 32)            # (32, 1) -> (1, 32)
    b4_vec = b4.reshape(1)                # SMEM scalar

    const2d = lambda i: (0, 0)            # weights/biases: same VMEM block every step
    out = pl.pallas_call(
        _seizure_mlp_kernel,
        out_shape=jax.ShapeDtypeStruct((num_tiles, 1, tb), jnp.float32),
        grid=(num_tiles,),
        in_specs=[
            pl.BlockSpec((tb, 178), lambda i: (i, 0)),        # x (batch-tiled)
            pl.BlockSpec((178, 128), const2d),                # w1
            pl.BlockSpec((1, 128), const2d),                  # b1
            pl.BlockSpec((128, 64), const2d),                 # w2
            pl.BlockSpec((1, 64), const2d),                   # b2
            pl.BlockSpec((64, 32), const2d),                  # w3
            pl.BlockSpec((1, 32), const2d),                   # b3
            pl.BlockSpec((1, 32), const2d),                   # w4 (as a row)
            pl.BlockSpec(memory_space=pltpu.MemorySpace.SMEM),  # b4 scalar
        ],
        out_specs=pl.BlockSpec((1, 1, tb), lambda i: (i, 0, 0)),  # lane-dense slab
        compiler_params=pltpu.CompilerParams(
            dimension_semantics=("parallel",)),               # 2 TCs on v7x; no-op v5e/v6e
    )(x, w1, b1[None, :], w2, b2[None, :], w3, b3[None, :], w4_row, b4_vec)

    # (num_tiles, 1, tb) -> (num_tiles*tb,) is a contiguous reshape (no transpose);
    # slice off the partial-tile tail and restore the (B, 1) layout of the module.
    out = out.reshape(num_tiles * tb)[:B]
    return out[:, None]                                       # (B, 1)


def _init_params(key):
    """Deterministic PyTorch-style (uniform +/- 1/sqrt(fan_in)) init."""
    dims = [(178, 128), (128, 64), (64, 32), (32, 1)]
    params = {}
    for i, (fan_in, fan_out) in enumerate(dims, start=1):
        key, kw, kb = jax.random.split(key, 3)
        bound = 1.0 / jnp.sqrt(jnp.float32(fan_in))
        params[f"w{i}"] = jax.random.uniform(
            kw, (fan_in, fan_out), jnp.float32, -bound, bound)
        params[f"b{i}"] = jax.random.uniform(
            kb, (fan_out,), jnp.float32, -bound, bound)
    return params


def _reference_forward(x, p):
    h = jnp.maximum(x @ p["w1"] + p["b1"], 0.0)
    h = jnp.maximum(h @ p["w2"] + p["b2"], 0.0)
    h = jnp.maximum(h @ p["w3"] + p["b3"], 0.0)
    return jax.nn.sigmoid(h @ p["w4"] + p["b4"])


if __name__ == "__main__":
    key = jax.random.PRNGKey(0)
    key, kx = jax.random.split(key)
    B = 10   # not a multiple of 8: exercises the partial trailing block path
    x = jax.random.normal(kx, (B, 178), jnp.float32)
    params = _init_params(key)

    out = seizure_nn_forward(x, params)
    out = jax.block_until_ready(out)

    ref = _reference_forward(x, params)
    assert out.shape == (B, 1), out.shape
    assert jnp.allclose(out, ref, atol=2e-5, rtol=2e-5), "mismatch vs reference"
    print("KERNEL_OK")
</pallas_src>

<mosaic_0001>
module attributes {stable_mosaic.version = 11 : i64} {
  func.func @_seizure_mlp_kernel(%arg0: i32, %arg1: memref<8x178xf32, #tpu.memory_space<vmem>>, %arg2: memref<178x128xf32, #tpu.memory_space<vmem>>, %arg3: memref<1x128xf32, #tpu.memory_space<vmem>>, %arg4: memref<128x64xf32, #tpu.memory_space<vmem>>, %arg5: memref<1x64xf32, #tpu.memory_space<vmem>>, %arg6: memref<64x32xf32, #tpu.memory_space<vmem>>, %arg7: memref<1x32xf32, #tpu.memory_space<vmem>>, %arg8: memref<1x32xf32, #tpu.memory_space<vmem>>, %arg9: memref<1xf32, #tpu.memory_space<smem>>, %arg10: memref<1x1x8xf32, #tpu.memory_space<vmem>>) attributes {dimension_semantics = [#tpu.dimension_semantics<parallel>], iteration_bounds = array<i64: 2>, scalar_prefetch = 0 : i64, scratch_operands = 0 : i64, tpu.core_type = #tpu.core_type<tc>, window_params = [{transform_indices = @transform_0, window_bounds = array<i64: 8, 178>}, {pipeline_mode = #tpu.pipeline_mode<synchronous>, transform_indices = @transform_1, window_bounds = array<i64: 178, 128>}, {pipeline_mode = #tpu.pipeline_mode<synchronous>, transform_indices = @transform_2, window_bounds = array<i64: 1, 128>}, {pipeline_mode = #tpu.pipeline_mode<synchronous>, transform_indices = @transform_3, window_bounds = array<i64: 128, 64>}, {pipeline_mode = #tpu.pipeline_mode<synchronous>, transform_indices = @transform_4, window_bounds = array<i64: 1, 64>}, {pipeline_mode = #tpu.pipeline_mode<synchronous>, transform_indices = @transform_5, window_bounds = array<i64: 64, 32>}, {pipeline_mode = #tpu.pipeline_mode<synchronous>, transform_indices = @transform_6, window_bounds = array<i64: 1, 32>}, {pipeline_mode = #tpu.pipeline_mode<synchronous>, transform_indices = @transform_7, window_bounds = array<i64: 1, 32>}, {transform_indices = @transform_8, window_bounds = array<i64: 1>}, {transform_indices = @transform_9, window_bounds = array<i64: 1, 1, 8>}]} {
    %c0 = arith.constant 0 : index
    %c0_0 = arith.constant 0 : index
    %0 = vector.load %arg1[%c0, %c0_0] : memref<8x178xf32, #tpu.memory_space<vmem>>, vector<8x178xf32>
    %c0_1 = arith.constant 0 : index
    %c0_2 = arith.constant 0 : index
    %1 = vector.load %arg2[%c0_1, %c0_2] : memref<178x128xf32, #tpu.memory_space<vmem>>, vector<178x128xf32>
    %cst = arith.constant dense<0.000000e+00> : vector<8x128xf32>
    %2 = tpu.matmul %0, %1, %cst {dimension_numbers = #tpu.dot_dimension_numbers<[1], [0], [0], [1], [0, 0, 1, 1], [], []>} : vector<8x178xf32>, vector<178x128xf32>, vector<8x128xf32> -> vector<8x128xf32>
    %c0_3 = arith.constant 0 : index
    %c0_4 = arith.constant 0 : index
    %3 = vector.load %arg3[%c0_3, %c0_4] : memref<1x128xf32, #tpu.memory_space<vmem>>, vector<1x128xf32>
    %4 = vector.broadcast %3 : vector<1x128xf32> to vector<8x128xf32>
    %5 = arith.addf %2, %4 : vector<8x128xf32>
    %cst_5 = arith.constant 0.000000e+00 : f32
    %6 = vector.broadcast %cst_5 : f32 to vector<8x128xf32>
    %7 = arith.maximumf %5, %6 : vector<8x128xf32>
    %c0_6 = arith.constant 0 : index
    %c0_7 = arith.constant 0 : index
    %8 = vector.load %arg4[%c0_6, %c0_7] : memref<128x64xf32, #tpu.memory_space<vmem>>, vector<128x64xf32>
    %cst_8 = arith.constant dense<0.000000e+00> : vector<8x64xf32>
    %9 = tpu.matmul %7, %8, %cst_8 {dimension_numbers = #tpu.dot_dimension_numbers<[1], [0], [0], [1], [0, 0, 1, 1], [], []>} : vector<8x128xf32>, vector<128x64xf32>, vector<8x64xf32> -> vector<8x64xf32>
    %c0_9 = arith.constant 0 : index
    %c0_10 = arith.constant 0 : index
    %10 = vector.load %arg5[%c0_9, %c0_10] : memref<1x64xf32, #tpu.memory_space<vmem>>, vector<1x64xf32>
    %11 = vector.broadcast %10 : vector<1x64xf32> to vector<8x64xf32>
    %12 = arith.addf %9, %11 : vector<8x64xf32>
    %cst_11 = arith.constant 0.000000e+00 : f32
    %13 = vector.broadcast %cst_11 : f32 to vector<8x64xf32>
    %14 = arith.maximumf %12, %13 : vector<8x64xf32>
    %c0_12 = arith.constant 0 : index
    %c0_13 = arith.constant 0 : index
    %15 = vector.load %arg6[%c0_12, %c0_13] : memref<64x32xf32, #tpu.memory_space<vmem>>, vector<64x32xf32>
    %cst_14 = arith.constant dense<0.000000e+00> : vector<8x32xf32>
    %16 = tpu.matmul %14, %15, %cst_14 {dimension_numbers = #tpu.dot_dimension_numbers<[1], [0], [0], [1], [0, 0, 1, 1], [], []>} : vector<8x64xf32>, vector<64x32xf32>, vector<8x32xf32> -> vector<8x32xf32>
    %c0_15 = arith.constant 0 : index
    %c0_16 = arith.constant 0 : index
    %17 = vector.load %arg7[%c0_15, %c0_16] : memref<1x32xf32, #tpu.memory_space<vmem>>, vector<1x32xf32>
    %18 = vector.broadcast %17 : vector<1x32xf32> to vector<8x32xf32>
    %19 = arith.addf %16, %18 : vector<8x32xf32>
    %cst_17 = arith.constant 0.000000e+00 : f32
    %20 = vector.broadcast %cst_17 : f32 to vector<8x32xf32>
    %21 = arith.maximumf %19, %20 : vector<8x32xf32>
    %c0_18 = arith.constant 0 : index
    %c0_19 = arith.constant 0 : index
    %22 = vector.load %arg8[%c0_18, %c0_19] : memref<1x32xf32, #tpu.memory_space<vmem>>, vector<1x32xf32>
    %cst_20 = arith.constant dense<0.000000e+00> : vector<1x8xf32>
    %23 = tpu.matmul %22, %21, %cst_20 {dimension_numbers = #tpu.dot_dimension_numbers<[1], [1], [0], [0], [0, 0, 1, 0], [], []>} : vector<1x32xf32>, vector<8x32xf32>, vector<1x8xf32> -> vector<1x8xf32>
    %c0_21 = arith.constant 0 : index
    %24 = memref.load %arg9[%c0_21] : memref<1xf32, #tpu.memory_space<smem>>
    %25 = vector.broadcast %24 : f32 to vector<1x8xf32>
    %26 = arith.addf %23, %25 : vector<1x8xf32>
    %27 = arith.negf %26 : vector<1x8xf32>
    %28 = math.exp %27 : vector<1x8xf32>
    %cst_22 = arith.constant 1.000000e+00 : f32
    %29 = vector.broadcast %cst_22 : f32 to vector<1x8xf32>
    %30 = arith.addf %29, %28 : vector<1x8xf32>
    %31 = arith.divf %29, %30 : vector<1x8xf32>
    %c0_23 = arith.constant 0 : index
    %c0_24 = arith.constant 0 : index
    %c0_25 = arith.constant 0 : index
    %32 = vector.load %arg10[%c0_23, %c0_24, %c0_25] : memref<1x1x8xf32, #tpu.memory_space<vmem>>, vector<1x1x8xf32>
    %33 = vector.shape_cast %32 : vector<1x1x8xf32> to vector<1x8xf32>
    %34 = vector.shape_cast %31 : vector<1x8xf32> to vector<1x1x8xf32>
    tpu.vector_store %arg10[%c0_23, %c0_24, %c0_25], %34 {strides = array<i32>} : memref<1x1x8xf32, #tpu.memory_space<vmem>>, vector<1x1x8xf32>,
    return
  }
  func.func @transform_0(%arg0: i32) -> (i32, i32) {
    %c0_i32 = arith.constant 0 : i32
    %c0_i32_0 = arith.constant 0 : i32
    return %arg0, %c0_i32 : i32, i32
  }
  func.func @transform_1(%arg0: i32) -> (i32, i32) {
    %c0_i32 = arith.constant 0 : i32
    %c0_i32_0 = arith.constant 0 : i32
    %c0_i32_1 = arith.constant 0 : i32
    return %c0_i32, %c0_i32_0 : i32, i32
  }
  func.func @transform_2(%arg0: i32) -> (i32, i32) {
    %c0_i32 = arith.constant 0 : i32
    %c0_i32_0 = arith.constant 0 : i32
    %c0_i32_1 = arith.constant 0 : i32
    return %c0_i32, %c0_i32_0 : i32, i32
  }
  func.func @transform_3(%arg0: i32) -> (i32, i32) {
    %c0_i32 = arith.constant 0 : i32
    %c0_i32_0 = arith.constant 0 : i32
    %c0_i32_1 = arith.constant 0 : i32
    return %c0_i32, %c0_i32_0 : i32, i32
  }
  func.func @transform_4(%arg0: i32) -> (i32, i32) {
    %c0_i32 = arith.constant 0 : i32
    %c0_i32_0 = arith.constant 0 : i32
    %c0_i32_1 = arith.constant 0 : i32
    return %c0_i32, %c0_i32_0 : i32, i32
  }
  func.func @transform_5(%arg0: i32) -> (i32, i32) {
    %c0_i32 = arith.constant 0 : i32
    %c0_i32_0 = arith.constant 0 : i32
    %c0_i32_1 = arith.constant 0 : i32
    return %c0_i32, %c0_i32_0 : i32, i32
  }
  func.func @transform_6(%arg0: i32) -> (i32, i32) {
    %c0_i32 = arith.constant 0 : i32
    %c0_i32_0 = arith.constant 0 : i32
    %c0_i32_1 = arith.constant 0 : i32
    return %c0_i32, %c0_i32_0 : i32, i32
  }
  func.func @transform_7(%arg0: i32) -> (i32, i32) {
    %c0_i32 = arith.constant 0 : i32
    %c0_i32_0 = arith.constant 0 : i32
    %c0_i32_1 = arith.constant 0 : i32
    return %c0_i32, %c0_i32_0 : i32, i32
  }
  func.func @transform_8(%arg0: i32) -> i32 {
    %c0_i32 = arith.constant 0 : i32
    %c0_i32_0 = arith.constant 0 : i32
    return %c0_i32 : i32
  }
  func.func @transform_9(%arg0: i32) -> (i32, i32, i32) {
    %c0_i32 = arith.constant 0 : i32
    %c0_i32_0 = arith.constant 0 : i32
    %c0_i32_1 = arith.constant 0 : i32
    return %arg0, %c0_i32, %c0_i32_0 : i32, i32, i32
  }
}

</mosaic_0001>

<llo_original>
// kernel: seizure_nn_forward.1
$region0: #{seizure_nn_forward.1}
  #allocation0 [shape = 'u32[]', space=smem, size = 0x4, offset = 0x4, fixed_abs, tag = 'smem constant byte address 0x4 - core index']
  #allocation1 [shape = 'u32[144,128]{1,0:T(1,128)}', space=vmem, size = 0x12000, scoped, tag = 'internal scratch']
  #allocation2 [shape = 'f32[1]{0:T(128)S(6)}', space=smem, size = 0x200, scoped, tag = 'scoped memory for seizure_nn_forward.1']
  %s0 = inlined_call_operand.vmem [shape: f32[10,178], index: 0, kind: input, shape index: {}]
  %s1 = inlined_call_operand.vmem [shape: f32[178,128], index: 1, kind: input, shape index: {}]
  %s2 = inlined_call_operand.vmem [shape: f32[1,128], index: 2, kind: input, shape index: {}]
  %s3 = inlined_call_operand.vmem [shape: f32[128,64], index: 3, kind: input, shape index: {}]
  %s4 = inlined_call_operand.vmem [shape: f32[1,64], index: 4, kind: input, shape index: {}]
  %s5 = inlined_call_operand.vmem [shape: f32[64,32], index: 5, kind: input, shape index: {}]
  %s6 = inlined_call_operand.vmem [shape: f32[1,32], index: 6, kind: input, shape index: {}]
  %s7 = inlined_call_operand.vmem [shape: f32[1,32], index: 7, kind: input, shape index: {}]
  %s8 = inlined_call_operand.<no memory space> [shape: f32[1], index: 8, kind: input, shape index: {}]
  %s9 = inlined_call_operand.vmem [shape: f32[2,1,8], index: 9, kind: output, shape index: {}]
  %s10 = sld [smem:[#allocation0]]
  $region69: #{seizure_nn_forward.1} parent=0
    _
  %s12 = ssub.s32 1, %s10
  %s13 = scalar_select 0, %s12, %s10
  %14 = sst [smem:[#allocation2]] %s8
  loop: start=0, step=1, limit=4
  $region2: #{seizure_nn_forward.1} parent=0 // loop_pre_header
    _
  $region3: #{seizure_nn_forward.1} parent=0 // loop_header
    %s16 = sphi 0, %s20
    %p17 = scmp.ge.s32.totalorder %s16, 4
    %s26 = sphi 0, %s28
    %s29 = sphi 0, %s26
    %s30 = sphi 0, %s29
    %s46 = sphi 0, %s30
    %s50 = sphi 0, %s50
    %s52 = sphi 0, %s50
    %s53 = sphi 0, %s52
    %s67 = sphi 0, %s53
    %s71 = sphi 0, %s71
    %s73 = sphi 0, %s71
    %s74 = sphi 0, %s73
    %s88 = sphi 0, %s74
    %s92 = sphi 0, %s92
    %s94 = sphi 0, %s92
    %s95 = sphi 0, %s94
    %s109 = sphi 0, %s95
    %s113 = sphi 0, %s113
    %s115 = sphi 0, %s113
    %s116 = sphi 0, %s115
    %s130 = sphi 0, %s116
    %s134 = sphi 0, %s134
    %s136 = sphi 0, %s134
    %s137 = sphi 0, %s136
    %s151 = sphi 0, %s137
    %s155 = sphi 0, %s155
    %s157 = sphi 0, %s155
    %s158 = sphi 0, %s157
    %s172 = sphi 0, %s158
    %s176 = sphi 0, %s176
    %s178 = sphi 0, %s176
    %s179 = sphi 0, %s178
    %s193 = sphi 0, %s179
    %s197 = sphi 0, %s197
    %s199 = sphi 0, %s197
    %s200 = sphi 0, %s199
    %s214 = sphi 0, %s200
    %s220 = sphi 0, %s222
    %s223 = sphi 0, %s220
    %s224 = sphi 0, %s223
    %s240 = sphi 0, %s224
  $region4: #{seizure_nn_forward.1} parent=0 // loop_header_branch
    %19 = sbr.rel (%p17) target = $region8
  $region5: #{seizure_nn_forward.1} parent=0 // loop_body
    %s21 = ssub.s32 %s16, 1
    %s22 = ssub.s32 %s16, 2
    %s23 = sadd.s32 %s16, 1
    %s24 = ssub.s32 %s16, %s23
    %p25 = scmp.eq.s32.totalorder %s24, 0
    %s27 = sadd.s32 %s26, 1
    %s28 = scalar_select %p25, %s26, %s27
    %p31 = pneg %p25
    %p32 = scmp.eq.s32.totalorder %s16, 1
    %p33 = por %p31, %p32
    %p34 = scmp.ne.s32.totalorder %s26, %s29
    %p35 = scmp.eq.s32.totalorder %s16, 0
    %p36 = por %p34, %p35
    %p37 = scmp.ne.s32.totalorder %s26, %s29
    %p38 = scmp.eq.s32.totalorder %s21, 1
    %p39 = por %p37, %p38
    %p40 = scmp.ne.s32.totalorder %s29, %s30
    %p41 = scmp.eq.s32.totalorder %s21, 0
    %p42 = por %p40, %p41
    %p43 = scmp.ne.s32.totalorder %s29, %s30
    %p44 = scmp.eq.s32.totalorder %s22, 1
    %p45 = por %p43, %p44
    %p47 = scmp.ne.s32.totalorder %s30, %s46
    %p48 = scmp.eq.s32.totalorder %s22, 0
    %p49 = por %p47, %p48
    %s51 = sadd.s32 %s50, 1
    %p54 = scmp.eq.s32.totalorder %s16, 1
    %p55 = scmp.ne.s32.totalorder %s50, %s52
    %p56 = scmp.eq.s32.totalorder %s16, 0
    %p57 = por %p55, %p56
    %p58 = scmp.ne.s32.totalorder %s50, %s52
    %p59 = scmp.eq.s32.totalorder %s21, 1
    %p60 = por %p58, %p59
    %p61 = scmp.ne.s32.totalorder %s52, %s53
    %p62 = scmp.eq.s32.totalorder %s21, 0
    %p63 = por %p61, %p62
    %p64 = scmp.ne.s32.totalorder %s52, %s53
    %p65 = scmp.eq.s32.totalorder %s22, 1
    %p66 = por %p64, %p65
    %p68 = scmp.ne.s32.totalorder %s53, %s67
    %p69 = scmp.eq.s32.totalorder %s22, 0
    %p70 = por %p68, %p69
    %s72 = sadd.s32 %s71, 1
    %p75 = scmp.eq.s32.totalorder %s16, 1
    %p76 = scmp.ne.s32.totalorder %s71, %s73
    %p77 = scmp.eq.s32.totalorder %s16, 0
    %p78 = por %p76, %p77
    %p79 = scmp.ne.s32.totalorder %s71, %s73
    %p80 = scmp.eq.s32.totalorder %s21, 1
    %p81 = por %p79, %p80
    %p82 = scmp.ne.s32.totalorder %s73, %s74
    %p83 = scmp.eq.s32.totalorder %s21, 0
    %p84 = por %p82, %p83
    %p85 = scmp.ne.s32.totalorder %s73, %s74
    %p86 = scmp.eq.s32.totalorder %s22, 1
    %p87 = por %p85, %p86
    %p89 = scmp.ne.s32.totalorder %s74, %s88
    %p90 = scmp.eq.s32.totalorder %s22, 0
    %p91 = por %p89, %p90
    %s93 = sadd.s32 %s92, 1
    %p96 = scmp.eq.s32.totalorder %s16, 1
    %p97 = scmp.ne.s32.totalorder %s92, %s94
    %p98 = scmp.eq.s32.totalorder %s16, 0
    %p99 = por %p97, %p98
    %p100 = scmp.ne.s32.totalorder %s92, %s94
    %p101 = scmp.eq.s32.totalorder %s21, 1
    %p102 = por %p100, %p101
    %p103 = scmp.ne.s32.totalorder %s94, %s95
    %p104 = scmp.eq.s32.totalorder %s21, 0
    %p105 = por %p103, %p104
    %p106 = scmp.ne.s32.totalorder %s94, %s95
    %p107 = scmp.eq.s32.totalorder %s22, 1
    %p108 = por %p106, %p107
    %p110 = scmp.ne.s32.totalorder %s95, %s109
    %p111 = scmp.eq.s32.totalorder %s22, 0
    %p112 = por %p110, %p111
    %s114 = sadd.s32 %s113, 1
    %p117 = scmp.eq.s32.totalorder %s16, 1
    %p118 = scmp.ne.s32.totalorder %s113, %s115
    %p119 = scmp.eq.s32.totalorder %s16, 0
    %p120 = por %p118, %p119
    %p121 = scmp.ne.s32.totalorder %s113, %s115
    %p122 = scmp.eq.s32.totalorder %s21, 1
    %p123 = por %p121, %p122
    %p124 = scmp.ne.s32.totalorder %s115, %s116
    %p125 = scmp.eq.s32.totalorder %s21, 0
    %p126 = por %p124, %p125
    %p127 = scmp.ne.s32.totalorder %s115, %s116
    %p128 = scmp.eq.s32.totalorder %s22, 1
    %p129 = por %p127, %p128
    %p131 = scmp.ne.s32.totalorder %s116, %s130
    %p132 = scmp.eq.s32.totalorder %s22, 0
    %p133 = por %p131, %p132
    %s135 = sadd.s32 %s134, 1
    %p138 = scmp.eq.s32.totalorder %s16, 1
    %p139 = scmp.ne.s32.totalorder %s134, %s136
    %p140 = scmp.eq.s32.totalorder %s16, 0
    %p141 = por %p139, %p140
    %p142 = scmp.ne.s32.totalorder %s134, %s136
    %p143 = scmp.eq.s32.totalorder %s21, 1
    %p144 = por %p142, %p143
    %p145 = scmp.ne.s32.totalorder %s136, %s137
    %p146 = scmp.eq.s32.totalorder %s21, 0
    %p147 = por %p145, %p146
    %p148 = scmp.ne.s32.totalorder %s136, %s137
    %p149 = scmp.eq.s32.totalorder %s22, 1
    %p150 = por %p148, %p149
    %p152 = scmp.ne.s32.totalorder %s137, %s151
    %p153 = scmp.eq.s32.totalorder %s22, 0
    %p154 = por %p152, %p153
    %s156 = sadd.s32 %s155, 1
    %p159 = scmp.eq.s32.totalorder %s16, 1
    %p160 = scmp.ne.s32.totalorder %s155, %s157
    %p161 = scmp.eq.s32.totalorder %s16, 0
    %p162 = por %p160, %p161
    %p163 = scmp.ne.s32.totalorder %s155, %s157
    %p164 = scmp.eq.s32.totalorder %s21, 1
    %p165 = por %p163, %p164
    %p166 = scmp.ne.s32.totalorder %s157, %s158
    %p167 = scmp.eq.s32.totalorder %s21, 0
    %p168 = por %p166, %p167
    %p169 = scmp.ne.s32.totalorder %s157, %s158
    %p170 = scmp.eq.s32.totalorder %s22, 1
    %p171 = por %p169, %p170
    %p173 = scmp.ne.s32.totalorder %s158, %s172
    %p174 = scmp.eq.s32.totalorder %s22, 0
    %p175 = por %p173, %p174
    %s177 = sadd.s32 %s176, 1
    %p180 = scmp.eq.s32.totalorder %s16, 1
    %p181 = scmp.ne.s32.totalorder %s176, %s178
    %p182 = scmp.eq.s32.totalorder %s16, 0
    %p183 = por %p181, %p182
    %p184 = scmp.ne.s32.totalorder %s176, %s178
    %p185 = scmp.eq.s32.totalorder %s21, 1
    %p186 = por %p184, %p185
    %p187 = scmp.ne.s32.totalorder %s178, %s179
    %p188 = scmp.eq.s32.totalorder %s21, 0
    %p189 = por %p187, %p188
    %p190 = scmp.ne.s32.totalorder %s178, %s179
    %p191 = scmp.eq.s32.totalorder %s22, 1
    %p192 = por %p190, %p191
    %p194 = scmp.ne.s32.totalorder %s179, %s193
    %p195 = scmp.eq.s32.totalorder %s22, 0
    %p196 = por %p194, %p195
    %s198 = sadd.s32 %s197, 1
    %p201 = scmp.eq.s32.totalorder %s16, 1
    %p202 = scmp.ne.s32.totalorder %s197, %s199
    %p203 = scmp.eq.s32.totalorder %s16, 0
    %p204 = por %p202, %p203
    %p205 = scmp.ne.s32.totalorder %s197, %s199
    %p206 = scmp.eq.s32.totalorder %s21, 1
    %p207 = por %p205, %p206
    %p208 = scmp.ne.s32.totalorder %s199, %s200
    %p209 = scmp.eq.s32.totalorder %s21, 0
    %p210 = por %p208, %p209
    %p211 = scmp.ne.s32.totalorder %s199, %s200
    %p212 = scmp.eq.s32.totalorder %s22, 1
    %p213 = por %p211, %p212
    %p215 = scmp.ne.s32.totalorder %s200, %s214
    %p216 = scmp.eq.s32.totalorder %s22, 0
    %p217 = por %p215, %p216
    %s218 = ssub.s32 %s16, %s23
    %p219 = scmp.eq.s32.totalorder %s218, 0
    %s221 = sadd.s32 %s220, 1
    %s222 = scalar_select %p219, %s220, %s221
    %p225 = pneg %p219
    %p226 = scmp.eq.s32.totalorder %s16, 1
    %p227 = por %p225, %p226
    %p228 = scmp.ne.s32.totalorder %s220, %s223
    %p229 = scmp.eq.s32.totalorder %s16, 0
    %p230 = por %p228, %p229
    %p231 = scmp.ne.s32.totalorder %s220, %s223
    %p232 = scmp.eq.s32.totalorder %s21, 1
    %p233 = por %p231, %p232
    %p234 = scmp.ne.s32.totalorder %s223, %s224
    %p235 = scmp.eq.s32.totalorder %s21, 0
    %p236 = por %p234, %p235
    %p237 = scmp.ne.s32.totalorder %s223, %s224
    %p238 = scmp.eq.s32.totalorder %s22, 1
    %p239 = por %p237, %p238
    %p241 = scmp.ne.s32.totalorder %s224, %s240
    %p242 = scmp.eq.s32.totalorder %s22, 0
    %p243 = por %p241, %p242
    %p244 = scmp.le.s32.totalorder 1, %s16
    %p245 = scmp.lt.s32.totalorder %s16, 3
    %p246 = pnand %p244, %p245
    %p247 = pneg %p246
    // Predicated region
    $region9: #{seizure_nn_forward.1} parent=5 // pred_check
      _
    $region10: #{seizure_nn_forward.1} parent=5 // pred_check_branch
      %249 = sbr.rel (%p246) target = $region12
    $region11: #{seizure_nn_forward.1} parent=5 // pred_region
      %s250 = ssub.s32 %s16, 1
      // Predicated region
      $region13: #{seizure_nn_forward.1} parent=11 // pred_check
        %p251 = pneg %p63
      $region14: #{seizure_nn_forward.1} parent=11 // pred_check_branch
        %253 = sbr.rel (%p251) target = $region16
      $region15: #{seizure_nn_forward.1} parent=11 // pred_region
        _
      $region16: #{seizure_nn_forward.1} parent=11 // pred_fallthru
        _
      // Predicated region
      $region17: #{seizure_nn_forward.1} parent=11 // pred_check
        %p254 = pneg %p84
      $region18: #{seizure_nn_forward.1} parent=11 // pred_check_branch
        %256 = sbr.rel (%p254) target = $region20
      $region19: #{seizure_nn_forward.1} parent=11 // pred_region
        _
      $region20: #{seizure_nn_forward.1} parent=11 // pred_fallthru
        _
      // Predicated region
      $region21: #{seizure_nn_forward.1} parent=11 // pred_check
        %p257 = pneg %p105
      $region22: #{seizure_nn_forward.1} parent=11 // pred_check_branch
        %259 = sbr.rel (%p257) target = $region24
      $region23: #{seizure_nn_forward.1} parent=11 // pred_region
        _
      $region24: #{seizure_nn_forward.1} parent=11 // pred_fallthru
        _
      // Predicated region
      $region25: #{seizure_nn_forward.1} parent=11 // pred_check
        %p260 = pneg %p126
      $region26: #{seizure_nn_forward.1} parent=11 // pred_check_branch
        %262 = sbr.rel (%p260) target = $region28
      $region27: #{seizure_nn_forward.1} parent=11 // pred_region
        _
      $region28: #{seizure_nn_forward.1} parent=11 // pred_fallthru
        _
      // Predicated region
      $region29: #{seizure_nn_forward.1} parent=11 // pred_check
        %p263 = pneg %p147
      $region30: #{seizure_nn_forward.1} parent=11 // pred_check_branch
        %265 = sbr.rel (%p263) target = $region32
      $region31: #{seizure_nn_forward.1} parent=11 // pred_region
        _
      $region32: #{seizure_nn_forward.1} parent=11 // pred_fallthru
        _
      // Predicated region
      $region33: #{seizure_nn_forward.1} parent=11 // pred_check
        %p266 = pneg %p168
      $region34: #{seizure_nn_forward.1} parent=11 // pred_check_branch
        %268 = sbr.rel (%p266) target = $region36
      $region35: #{seizure_nn_forward.1} parent=11 // pred_region
        _
      $region36: #{seizure_nn_forward.1} parent=11 // pred_fallthru
        _
      // Predicated region
      $region37: #{seizure_nn_forward.1} parent=11 // pred_check
        %p269 = pneg %p189
      $region38: #{seizure_nn_forward.1} parent=11 // pred_check_branch
        %271 = sbr.rel (%p269) target = $region40
      $region39: #{seizure_nn_forward.1} parent=11 // pred_region
        _
      $region40: #{seizure_nn_forward.1} parent=11 // pred_fallthru
        _
      // Predicated region
      $region41: #{seizure_nn_forward.1} parent=11 // pred_check
        %p272 = pneg %p210
      $region42: #{seizure_nn_forward.1} parent=11 // pred_check_branch
        %274 = sbr.rel (%p272) target = $region44
      $region43: #{seizure_nn_forward.1} parent=11 // pred_region
        _
      $region44: #{seizure_nn_forward.1} parent=11 // pred_fallthru
        _
    $region12: #{seizure_nn_forward.1} parent=5 // pred_fallthru
      _
    %p275 = scmp.lt.s32.totalorder %s16, 2
    // Predicated region
    $region45: #{seizure_nn_forward.1} parent=5 // pred_check
      %p276 = pneg %p275
    $region46: #{seizure_nn_forward.1} parent=5 // pred_check_branch
      %278 = sbr.rel (%p276) target = $region48
    $region47: #{seizure_nn_forward.1} parent=5 // pred_region
      // Predicated region
      $region49: #{seizure_nn_forward.1} parent=47 // pred_check
        %p279 = pneg %p36
      $region50: #{seizure_nn_forward.1} parent=47 // pred_check_branch
        %281 = sbr.rel (%p279) target = $region52
      $region51: #{seizure_nn_forward.1} parent=47 // pred_region
        %p282 = scmp.lt.s32.totalorder %s16, 1
        %s283 = scalar_select %p282, %s16, 1
        %s284 = smul.addr %s283, 2
        %s285 = smul.addr %s284, 8
        %s286 = scalar_lea.vmem %s0, %s285
      $region52: #{seizure_nn_forward.1} parent=47 // pred_fallthru
        _
    $region48: #{seizure_nn_forward.1} parent=5 // pred_fallthru
      _
    %p287 = scmp.le.s32.totalorder 1, %s16
    %p288 = scmp.lt.s32.totalorder %s16, 3
    %p289 = pnand %p287, %p288
    %p290 = pneg %p289
    // Predicated region
    $region53: #{seizure_nn_forward.1} parent=5 // pred_check
      _
    $region54: #{seizure_nn_forward.1} parent=5 // pred_check_branch
      %292 = sbr.rel (%p289) target = $region56
    $region55: #{seizure_nn_forward.1} parent=5 // pred_region
      %s293 = ssub.s32 %s16, 1
      %p294 = scmp.lt.s32.totalorder %s21, 1
      %s295 = scalar_select %p294, %s21, 1
      %s296 = smul.addr %s295, 2
      %s297 = smul.addr %s296, 8
      %s298 = scalar_lea.vmem %s0, %s297
      %p299 = pneg %p42
      %p300 = pneg %p39
      %p301 = pneg %p63
      %p302 = pneg %p60
      %p303 = pneg %p84
      %p304 = pneg %p81
      %p305 = pneg %p105
      %p306 = pneg %p102
      %p307 = pneg %p126
      %p308 = pneg %p123
      %p309 = pneg %p147
      %p310 = pneg %p144
      %p311 = pneg %p168
      %p312 = pneg %p165
      %p313 = pneg %p189
      %p314 = pneg %p186
      %p315 = pneg %p210
      %p316 = pneg %p207
      %p317 = pneg %p236
      %p318 = pneg %p233
      %p319 = scmp.lt.s32.totalorder %s21, 1
      %s320 = scalar_select %p319, %s21, 1
      %s321 = scalar_lea.vmem %s9, %s320
      %p322 = scmp.lt.s32.totalorder %s21, 1
      %s323 = scalar_select %p322, %s21, 1
      %s324 = smul.addr %s323, 2
      %s325 = smul.addr %s324, 8
      %s326 = scalar_lea.vmem %s0, %s325
      %p327 = scmp.lt.s32.totalorder %s21, 1
      %s328 = scalar_select %p327, %s21, 1
      %s329 = scalar_lea.vmem %s9, %s328
      %v330 = vld [vmem:[%s326] sm:$0xff]
      %v331 = vld [vmem:[%s326 + $0x8] sm:$0xff]
      %v332 = vld [vmem:[%s1] sm:$0xff]
      %v333 = vld [vmem:[%s1 + $0x8] sm:$0xff]
      %v334 = vld [vmem:[%s1 + $0x10] sm:$0xff]
      %v335 = vld [vmem:[%s1 + $0x18] sm:$0xff]
      %v336 = vld [vmem:[%s1 + $0x20] sm:$0xff]
      %v337 = vld [vmem:[%s1 + $0x28] sm:$0xff]
      %v338 = vld [vmem:[%s1 + $0x30] sm:$0xff]
      %v339 = vld [vmem:[%s1 + $0x38] sm:$0xff]
      %v340 = vld [vmem:[%s1 + $0x40] sm:$0xff]
      %v341 = vld [vmem:[%s1 + $0x48] sm:$0xff]
      %v342 = vld [vmem:[%s1 + $0x50] sm:$0xff]
      %v343 = vld [vmem:[%s1 + $0x58] sm:$0xff]
      %v344 = vld [vmem:[%s1 + $0x60] sm:$0xff]
      %v345 = vld [vmem:[%s1 + $0x68] sm:$0xff]
      %v346 = vld [vmem:[%s1 + $0x70] sm:$0xff]
      %v347 = vld [vmem:[%s1 + $0x78] sm:$0xff]
      %v348 = vld [vmem:[%s1 + $0x80] sm:$0xff]
      %v349 = vld [vmem:[%s1 + $0x88] sm:$0xff]
      %v350 = vld [vmem:[%s1 + $0x90] sm:$0xff]
      %v351 = vld [vmem:[%s1 + $0x98] sm:$0xff]
      %v352 = vld [vmem:[%s1 + $0xa0] sm:$0xff]
      %v353 = vld [vmem:[%s1 + $0xa8] sm:$0xff]
      %v354 = vld [vmem:[%s1 + $0xb0] sm:$0x3]
      %v355 = vld [vmem:[%s2] sm:$0x1]
      %v357 = vlaneseq
      %v358 = vshrl.u32 %v357, 7
      %v359 = vsub.s32 0, %v358
      %v360 = vrot.slane %v355, %v359
      %vm362 = vcmask 408576
      %v364 = vsel %vm362, %v331, 0
      %vm366 = vcmask 1041408
      %v368 = vsel %vm366, %v354, 0
      %370 = vmatprep.subr.mxu0 0.0
      %371 = vmatpush1.msra.mxu0 %v332
      %372 = vmatprep.subr.mxu0 0.0
      %373 = vmatpush1.msra.mxu0 %v333
      %374 = vmatprep.subr.mxu0 0.0
      %375 = vmatpush1.msra.mxu0 %v334
      %376 = vmatprep.subr.mxu0 0.0
      %377 = vmatpush1.msra.mxu0 %v335
      %378 = vmatprep.subr.mxu0 0.0
      %379 = vmatpush1.msra.mxu0 %v336
      %380 = vmatprep.subr.mxu0 0.0
      %381 = vmatpush1.msra.mxu0 %v337
      %382 = vmatprep.subr.mxu0 0.0
      %383 = vmatpush1.msra.mxu0 %v338
      %384 = vmatprep.subr.mxu0 0.0
      %385 = vmatpush1.msra.mxu0 %v339
      %386 = vmatprep.subr.mxu0 0.0
      %387 = vmatpush1.msra.mxu0 %v340
      %388 = vmatprep.subr.mxu0 0.0
      %389 = vmatpush1.msra.mxu0 %v341
      %390 = vmatprep.subr.mxu0 0.0
      %391 = vmatpush1.msra.mxu0 %v342
      %392 = vmatprep.subr.mxu0 0.0
      %393 = vmatpush1.msra.mxu0 %v343
      %394 = vmatprep.subr.mxu0 0.0
      %395 = vmatpush1.msra.mxu0 %v344
      %396 = vmatprep.subr.mxu0 0.0
      %397 = vmatpush1.msra.mxu0 %v345
      %398 = vmatprep.subr.mxu0 0.0
      %399 = vmatpush1.msra.mxu0 %v346
      %400 = vmatprep.subr.mxu0 0.0
      %401 = vmatpush1.msra.mxu0 %v347
      %402 = vmatprep.subr.mxu0 0.0
      %403 = vmatpush1.msra.mxu0 %v348
      %404 = vmatprep.subr.mxu0 0.0
      %405 = vmatpush1.msra.mxu0 %v349
      %406 = vmatprep.subr.mxu0 0.0
      %407 = vmatpush1.msra.mxu0 %v350
      %408 = vmatprep.subr.mxu0 0.0
      %409 = vmatpush1.msra.mxu0 %v351
      %410 = vmatprep.subr.mxu0 0.0
      %411 = vmatpush1.msra.mxu0 %v352
      %412 = vmatprep.subr.mxu0 0.0
      %413 = vmatpush1.msra.mxu0 %v353
      %414 = vmatprep.subr.mxu0 0.0
      %415 = vmatpush1.msra.mxu0 %v368
      %416 = vmatprep.subr.mxu0 0.0
      %417 = vmatpush1.msra.mxu0 0.0
      %418 = vmatprep.subr.mxu0 0.0
      %419 = vmatpush1.msra.mxu0 0.0
      %420 = vmatprep.subr.mxu0 0.0
      %421 = vmatpush1.msra.mxu0 0.0
      %422 = vmatprep.subr.mxu0 0.0
      %423 = vmatpush1.msra.mxu0 0.0
      %424 = vmatprep.subr.mxu0 0.0
      %425 = vmatpush1.msra.mxu0 0.0
      %426 = vmatprep.subr.mxu0 0.0
      %427 = vmatpush1.msra.mxu0 0.0
      %428 = vmatprep.subr.mxu0 0.0
      %429 = vmatpush1.msra.mxu0 0.0
      %430 = vmatprep.subr.mxu0 0.0
      %431 = vmatpush1.msra.mxu0 0.0
      %432 = vmatprep.subr.mxu0 0.0
      %433 = vmatpush1.msra.mxu0 0.0
      %434 = vmatprep.mubr.f32.mxu0 %v364
      %435 = vmatmul.mubr.f32.gmra.mrb[0].mxu0 %v330
      %v436 = vpop.f32.mrb[0].mxu0
      %v437 = vadd.f32 %v360, %v436
      %v438 = vpop.f32.mrb[0].mxu0
      %439 = vdwg.mxu0
      %v440 = vmax.f32 %v437, 0.0
      %v441 = vld [vmem:[%s3] sm:$0xff]
      %v442 = vld [vmem:[%s3 + $0x8] sm:$0xff]
      %v443 = vld [vmem:[%s3 + $0x10] sm:$0xff]
      %v444 = vld [vmem:[%s3 + $0x18] sm:$0xff]
      %v445 = vld [vmem:[%s3 + $0x20] sm:$0xff]
      %v446 = vld [vmem:[%s3 + $0x28] sm:$0xff]
      %v447 = vld [vmem:[%s3 + $0x30] sm:$0xff]
      %v448 = vld [vmem:[%s3 + $0x38] sm:$0xff]
      %v449 = vld [vmem:[%s3 + $0x40] sm:$0xff]
      %v450 = vld [vmem:[%s3 + $0x48] sm:$0xff]
      %v451 = vld [vmem:[%s3 + $0x50] sm:$0xff]
      %v452 = vld [vmem:[%s3 + $0x58] sm:$0xff]
      %v453 = vld [vmem:[%s3 + $0x60] sm:$0xff]
      %v454 = vld [vmem:[%s3 + $0x68] sm:$0xff]
      %v455 = vld [vmem:[%s3 + $0x70] sm:$0xff]
      %v456 = vld [vmem:[%s3 + $0x78] sm:$0xff]
      %v457 = vld [vmem:[%s4] sm:$0x1]
      %v459 = vlaneseq
      %v460 = vshrl.u32 %v459, 7
      %v461 = vsub.s32 0, %v460
      %v462 = vrot.slane %v457, %v461
      %464 = vmatprep.subr.mxu0 0.0
      %465 = vmatpush1.msra.mxu0 %v441
      %466 = vmatprep.subr.mxu0 0.0
      %467 = vmatpush1.msra.mxu0 %v442
      %468 = vmatprep.subr.mxu0 0.0
      %469 = vmatpush1.msra.mxu0 %v443
      %470 = vmatprep.subr.mxu0 0.0
      %471 = vmatpush1.msra.mxu0 %v444
      %472 = vmatprep.subr.mxu0 0.0
      %473 = vmatpush1.msra.mxu0 %v445
      %474 = vmatprep.subr.mxu0 0.0
      %475 = vmatpush1.msra.mxu0 %v446
      %476 = vmatprep.subr.mxu0 0.0
      %477 = vmatpush1.msra.mxu0 %v447
      %478 = vmatprep.subr.mxu0 0.0
      %479 = vmatpush1.msra.mxu0 %v448
      %480 = vmatprep.subr.mxu0 0.0
      %481 = vmatpush1.msra.mxu0 %v449
      %482 = vmatprep.subr.mxu0 0.0
      %483 = vmatpush1.msra.mxu0 %v450
      %484 = vmatprep.subr.mxu0 0.0
      %485 = vmatpush1.msra.mxu0 %v451
      %486 = vmatprep.subr.mxu0 0.0
      %487 = vmatpush1.msra.mxu0 %v452
      %488 = vmatprep.subr.mxu0 0.0
      %489 = vmatpush1.msra.mxu0 %v453
      %490 = vmatprep.subr.mxu0 0.0
      %491 = vmatpush1.msra.mxu0 %v454
      %492 = vmatprep.subr.mxu0 0.0
      %493 = vmatpush1.msra.mxu0 %v455
      %494 = vmatprep.subr.mxu0 0.0
      %495 = vmatpush1.msra.mxu0 %v456
      %496 = vmatprep.subr.mxu0 0.0
      %497 = vmatpush1.msra.mxu0 0.0
      %498 = vmatprep.subr.mxu0 0.0
      %499 = vmatpush1.msra.mxu0 0.0
      %500 = vmatprep.subr.mxu0 0.0
      %501 = vmatpush1.msra.mxu0 0.0
      %502 = vmatprep.subr.mxu0 0.0
      %503 = vmatpush1.msra.mxu0 0.0
      %504 = vmatprep.subr.mxu0 0.0
      %505 = vmatpush1.msra.mxu0 0.0
      %506 = vmatprep.subr.mxu0 0.0
      %507 = vmatpush1.msra.mxu0 0.0
      %508 = vmatprep.subr.mxu0 0.0
      %509 = vmatpush1.msra.mxu0 0.0
      %510 = vmatprep.subr.mxu0 0.0
      %511 = vmatpush1.msra.mxu0 0.0
      %512 = vmatprep.subr.mxu0 0.0
      %513 = vmatpush1.msra.mxu0 0.0
      %514 = vmatprep.subr.mxu0 0.0
      %515 = vmatpush1.msra.mxu0 0.0
      %516 = vmatprep.subr.mxu0 0.0
      %517 = vmatpush1.msra.mxu0 0.0
      %518 = vmatprep.subr.mxu0 0.0
      %519 = vmatpush1.msra.mxu0 0.0
      %520 = vmatprep.subr.mxu0 0.0
      %521 = vmatpush1.msra.mxu0 0.0
      %522 = vmatprep.subr.mxu0 0.0
      %523 = vmatpush1.msra.mxu0 0.0
      %524 = vmatprep.subr.mxu0 0.0
      %525 = vmatpush1.msra.mxu0 0.0
      %526 = vmatprep.subr.mxu0 0.0
      %527 = vmatpush1.msra.mxu0 0.0
      %528 = vmatprep.mubr.f32.mxu0 0.0
      %529 = vmatmul.mubr.f32.gmra.mrb[0].mxu0 %v440
      %v530 = vpop.f32.mrb[0].mxu0
      %v531 = vadd.f32 %v462, %v530
      %v532 = vpop.f32.mrb[0].mxu0
      %533 = vdwg.mxu0
      %v534 = vmax.f32 %v531, 0.0
      %v535 = vld [vmem:[%s5] sm:$0xff]
      %v536 = vld [vmem:[%s5 + $0x8] sm:$0xff]
      %v537 = vld [vmem:[%s5 + $0x10] sm:$0xff]
      %v538 = vld [vmem:[%s5 + $0x18] sm:$0xff]
      %v539 = vld [vmem:[%s5 + $0x20] sm:$0xff]
      %v540 = vld [vmem:[%s5 + $0x28] sm:$0xff]
      %v541 = vld [vmem:[%s5 + $0x30] sm:$0xff]
      %v542 = vld [vmem:[%s5 + $0x38] sm:$0xff]
      %v543 = vld [vmem:[%s6] sm:$0x1]
      %v545 = vlaneseq
      %v546 = vshrl.u32 %v545, 7
      %v547 = vsub.s32 0, %v546
      %v548 = vrot.slane %v543, %v547
      %vm550 = vcmask 523264
      %v552 = vsel %vm550, %v534, 0
      %554 = vmatprep.subr.mxu0 0.0
      %555 = vmatpush1.msra.mxu0 %v535
      %556 = vmatprep.subr.mxu0 0.0
      %557 = vmatpush1.msra.mxu0 %v536
      %558 = vmatprep.subr.mxu0 0.0
      %559 = vmatpush1.msra.mxu0 %v537
      %560 = vmatprep.subr.mxu0 0.0
      %561 = vmatpush1.msra.mxu0 %v538
      %562 = vmatprep.subr.mxu0 0.0
      %563 = vmatpush1.msra.mxu0 %v539
      %564 = vmatprep.subr.mxu0 0.0
      %565 = vmatpush1.msra.mxu0 %v540
      %566 = vmatprep.subr.mxu0 0.0
      %567 = vmatpush1.msra.mxu0 %v541
      %568 = vmatprep.subr.mxu0 0.0
      %569 = vmatpush1.msra.mxu0 %v542
      %570 = vmatprep.subr.mxu0 0.0
      %571 = vmatpush1.msra.mxu0 0.0
      %572 = vmatprep.subr.mxu0 0.0
      %573 = vmatpush1.msra.mxu0 0.0
      %574 = vmatprep.subr.mxu0 0.0
      %575 = vmatpush1.msra.mxu0 0.0
      %576 = vmatprep.subr.mxu0 0.0
      %577 = vmatpush1.msra.mxu0 0.0
      %578 = vmatprep.subr.mxu0 0.0
      %579 = vmatpush1.msra.mxu0 0.0
      %580 = vmatprep.subr.mxu0 0.0
      %581 = vmatpush1.msra.mxu0 0.0
      %582 = vmatprep.subr.mxu0 0.0
      %583 = vmatpush1.msra.mxu0 0.0
      %584 = vmatprep.subr.mxu0 0.0
      %585 = vmatpush1.msra.mxu0 0.0
      %586 = vmatprep.subr.mxu0 0.0
      %587 = vmatpush1.msra.mxu0 0.0
      %588 = vmatprep.subr.mxu0 0.0
      %589 = vmatpush1.msra.mxu0 0.0
      %590 = vmatprep.subr.mxu0 0.0
      %591 = vmatpush1.msra.mxu0 0.0
      %592 = vmatprep.subr.mxu0 0.0
      %593 = vmatpush1.msra.mxu0 0.0
      %594 = vmatprep.subr.mxu0 0.0
      %595 = vmatpush1.msra.mxu0 0.0
      %596 = vmatprep.subr.mxu0 0.0
      %597 = vmatpush1.msra.mxu0 0.0
      %598 = vmatprep.subr.mxu0 0.0
      %599 = vmatpush1.msra.mxu0 0.0
      %600 = vmatprep.subr.mxu0 0.0
      %601 = vmatpush1.msra.mxu0 0.0
      %602 = vmatprep.subr.mxu0 0.0
      %603 = vmatpush1.msra.mxu0 0.0
      %604 = vmatprep.subr.mxu0 0.0
      %605 = vmatpush1.msra.mxu0 0.0
      %606 = vmatprep.subr.mxu0 0.0
      %607 = vmatpush1.msra.mxu0 0.0
      %608 = vmatprep.subr.mxu0 0.0
      %609 = vmatpush1.msra.mxu0 0.0
      %610 = vmatprep.subr.mxu0 0.0
      %611 = vmatpush1.msra.mxu0 0.0
      %612 = vmatprep.subr.mxu0 0.0
      %613 = vmatpush1.msra.mxu0 0.0
      %614 = vmatprep.subr.mxu0 0.0
      %615 = vmatpush1.msra.mxu0 0.0
      %616 = vmatprep.subr.mxu0 0.0
      %617 = vmatpush1.msra.mxu0 0.0
      %618 = vmatprep.mubr.f32.mxu0 0.0
      %619 = vmatmul.mubr.f32.gmra.mrb[0].mxu0 %v552
      %v620 = vpop.f32.mrb[0].mxu0
      %v621 = vadd.f32 %v548, %v620
      %v622 = vpop.f32.mrb[0].mxu0
      %623 = vdwg.mxu0
      %v624 = vmax.f32 %v621, 0.0
      %v625 = vld [vmem:[%s7] sm:$0x1]
      %s626 = sld [smem:[#allocation2]]
      %v627 = vstv %s626
      %vm628 = vcmask 261120
      %v630 = vsel %vm628, %v625, 0
      %v633 = vsel %vm628, %v624, 0
      %635 = vmatprep.subr.mxu0 0.0
      %636 = vmatpush1.xpose.msra.mxu0 %v633
      %637 = vmatprep.subr.mxu0 0.0
      %638 = vmatpush1.xpose.msra.mxu0 0.0
      %639 = vmatprep.subr.mxu0 0.0
      %640 = vmatpush1.xpose.msra.mxu0 0.0
      %641 = vmatprep.subr.mxu0 0.0
      %642 = vmatpush1.xpose.msra.mxu0 0.0
      %643 = vmatprep.subr.mxu0 0.0
      %644 = vmatpush1.xpose.msra.mxu0 0.0
      %645 = vmatprep.subr.mxu0 0.0
      %646 = vmatpush1.xpose.msra.mxu0 0.0
      %647 = vmatprep.subr.mxu0 0.0
      %648 = vmatpush1.xpose.msra.mxu0 0.0
      %649 = vmatprep.subr.mxu0 0.0
      %650 = vmatpush1.xpose.msra.mxu0 0.0
      %651 = vmatprep.subr.mxu0 0.0
      %652 = vmatpush1.xpose.msra.mxu0 0.0
      %653 = vmatprep.subr.mxu0 0.0
      %654 = vmatpush1.xpose.msra.mxu0 0.0
      %655 = vmatprep.subr.mxu0 0.0
      %656 = vmatpush1.xpose.msra.mxu0 0.0
      %657 = vmatprep.subr.mxu0 0.0
      %658 = vmatpush1.xpose.msra.mxu0 0.0
      %659 = vmatprep.subr.mxu0 0.0
      %660 = vmatpush1.xpose.msra.mxu0 0.0
      %661 = vmatprep.subr.mxu0 0.0
      %662 = vmatpush1.xpose.msra.mxu0 0.0
      %663 = vmatprep.subr.mxu0 0.0
      %664 = vmatpush1.xpose.msra.mxu0 0.0
      %665 = vmatprep.subr.mxu0 0.0
      %666 = vmatpush1.xpose.msra.mxu0 0.0
      %667 = vmatprep.subr.mxu0 0.0
      %668 = vmatpush1.xpose.msra.mxu0 0.0
      %669 = vmatprep.subr.mxu0 0.0
      %670 = vmatpush1.xpose.msra.mxu0 0.0
      %671 = vmatprep.subr.mxu0 0.0
      %672 = vmatpush1.xpose.msra.mxu0 0.0
      %673 = vmatprep.subr.mxu0 0.0
      %674 = vmatpush1.xpose.msra.mxu0 0.0
      %675 = vmatprep.subr.mxu0 0.0
      %676 = vmatpush1.xpose.msra.mxu0 0.0
      %677 = vmatprep.subr.mxu0 0.0
      %678 = vmatpush1.xpose.msra.mxu0 0.0
      %679 = vmatprep.subr.mxu0 0.0
      %680 = vmatpush1.xpose.msra.mxu0 0.0
      %681 = vmatprep.subr.mxu0 0.0
      %682 = vmatpush1.xpose.msra.mxu0 0.0
      %683 = vmatprep.subr.mxu0 0.0
      %684 = vmatpush1.xpose.msra.mxu0 0.0
      %685 = vmatprep.subr.mxu0 0.0
      %686 = vmatpush1.xpose.msra.mxu0 0.0
      %687 = vmatprep.subr.mxu0 0.0
      %688 = vmatpush1.xpose.msra.mxu0 0.0
      %689 = vmatprep.subr.mxu0 0.0
      %690 = vmatpush1.xpose.msra.mxu0 0.0
      %691 = vmatprep.subr.mxu0 0.0
      %692 = vmatpush1.xpose.msra.mxu0 0.0
      %693 = vmatprep.subr.mxu0 0.0
      %694 = vmatpush1.xpose.msra.mxu0 0.0
      %695 = vmatprep.subr.mxu0 0.0
      %696 = vmatpush1.xpose.msra.mxu0 0.0
      %697 = vmatprep.subr.mxu0 0.0
      %698 = vmatpush1.xpose.msra.mxu0 0.0
      %699 = vmatprep.mubr.f32.mxu0 0.0
      %700 = vmatmul.mubr.f32.gmra.mrb[0].mxu0 %v630
      %v701 = vpop.f32.mrb[0].mxu0
      %v702 = vadd.f32 %v627, %v701
      %v703 = vpop.f32.mrb[0].mxu0
      %704 = vdwg.mxu0
      %v705 = vxor.u32 %v702, 2147483648
      %v706 = vmul.f32 %v705, 1.442695
      %v707 = vpow.pop %v706
      %v708 = vadd.f32 %v707, 1.0
      %v709 = vrcp.pop %v708
      %v710 = vmul.f32 1.0, %v709
      %vm711 = vcmask 57344
      %712 = vst.msk [vmem:[%s329] sm:$0x1] %vm711, %v710
      %p713 = scmp.lt.s32.totalorder %s21, 1
      %s714 = scalar_select %p713, %s21, 1
      %s715 = scalar_lea.vmem %s9, %s714
      // Predicated region
      $region57: #{seizure_nn_forward.1} parent=55 // pred_check
        %p716 = pneg %p233
      $region58: #{seizure_nn_forward.1} parent=55 // pred_check_branch
        %718 = sbr.rel (%p716) target = $region60
      $region59: #{seizure_nn_forward.1} parent=55 // pred_region
        _
      $region60: #{seizure_nn_forward.1} parent=55 // pred_fallthru
        _
    $region56: #{seizure_nn_forward.1} parent=5 // pred_fallthru
      _
    %p719 = scmp.le.s32.totalorder 2, %s16
    // Predicated region
    $region61: #{seizure_nn_forward.1} parent=5 // pred_check
      %p720 = pneg %p719
    $region62: #{seizure_nn_forward.1} parent=5 // pred_check_branch
      %722 = sbr.rel (%p720) target = $region64
    $region63: #{seizure_nn_forward.1} parent=5 // pred_region
      %s723 = ssub.s32 %s16, 2
      // Predicated region
      $region65: #{seizure_nn_forward.1} parent=63 // pred_check
        %p724 = pneg %p239
      $region66: #{seizure_nn_forward.1} parent=63 // pred_check_branch
        %726 = sbr.rel (%p724) target = $region68
      $region67: #{seizure_nn_forward.1} parent=63 // pred_region
        %p727 = scmp.lt.s32.totalorder %s22, 1
        %s728 = scalar_select %p727, %s22, 1
        %s729 = scalar_lea.vmem %s9, %s728
      $region68: #{seizure_nn_forward.1} parent=63 // pred_fallthru
        _
    $region64: #{seizure_nn_forward.1} parent=5 // pred_fallthru
      _
  $region6: #{seizure_nn_forward.1} parent=0 // loop_footer
    %s20 = sadd.s32 1, %s16
  $region7: #{seizure_nn_forward.1} parent=0 // loop_footer_branch
    %15 = sbr.rel target = $region3
  $region8: #{seizure_nn_forward.1} parent=0 // loop_exit
    _

</llo_original>
